<compile_context>
chip_gen: v6e
topology: v6e:2x2x1
jax: 0.10.0
libtpu: 0.0.40
codegen_flags: <defaults>
</compile_context>

<pallas_src>
import math
from functools import partial

import jax
import jax.numpy as jnp
from jax.experimental import pallas as pl
from jax.experimental.pallas import tpu as pltpu

A = 0.1                     # fuzzyDist 'a'; exponent 2*b = 4 is even -> no abs
INV_A = 1.0 / A
NB = 100                    # histogram bins: torch.arange(-10, 10, 0.2)
BINWIDTH = 0.2
NB_PAD = 128                # bin rows padded to a full 128-sublane block
SENT_X = 1.0e6              # sentinel for padded sample columns (scaled -> 1e7)
SENT_B = -1.0e6             # sentinel for padded bin rows (already in x/a units)


def _hist_kernel(x_ref, bins_ref, out_ref, hist_acc, *, tile):
    """Accumulate a lane-dense (NB_PAD, 128) partial soft-histogram."""
    j = pl.program_id(1)

    @pl.when(j == 0)
    def _():
        hist_acc[...] = jnp.zeros_like(hist_acc)

    # Scale x once on its (1, tile) row (touches ~tile/128 vregs, not 128x
    # that); bins arrive pre-divided by `a` from the host.
    xs = x_ref[...] * INV_A
    d = xs - bins_ref[...]                  # (NB_PAD, tile) via broadcast
    d2 = d * d
    d4 = d2 * d2                            # (|x - bin| / a)^4, abs-free
    dist = pl.reciprocal(1.0 + d4, approx=True)   # EUP slot, ~free vs VALU

    # Lane-dense accumulation: unmasked full-vreg VALU adds over 128-lane
    # chunks (static slices on 128-lane boundaries -> no relayout, no XLU).
    acc = hist_acc[...]
    for k in range(tile // 128):            # static, fully unrolled
        acc = acc + dist[:, k * 128:(k + 1) * 128]
    hist_acc[...] = acc

    @pl.when(j == pl.num_programs(1) - 1)
    def _():
        out_ref[...] = hist_acc[...]        # lane-dense (128, 128) store


def _round_up(n, m):
    return ((n + m - 1) // m) * m


def _cdiv(n, m):
    return (n + m - 1) // m


def _tile_and_vmem_limit():
    """Per-generation tile length and VMEM budget (guarded hardware query)."""
    try:
        vmem_cap = pltpu.get_tpu_info().vmem_capacity_bytes
    except Exception:
        vmem_cap = 64 << 20                 # assume the smallest (v7x per-TC)
    if vmem_cap >= (128 << 20):             # v5e / v6e: 128 MiB VMEM
        return 16384, 80 << 20
    return 8192, 40 << 20                   # v7x and unknown parts


def _params():
    """Deterministic parameters from NormalDivLoss.__init__ (no checkpoint)."""
    bins = -10.0 + BINWIDTH * jnp.arange(NB, dtype=jnp.float32)
    # Normal(0, 0.3).log_prob(bins).exp() * binwidth
    log_prob = (-0.5 * jnp.square(bins / 0.3)
                - jnp.log(jnp.float32(0.3))
                - 0.5 * jnp.log(jnp.float32(2.0 * math.pi)))
    target = BINWIDTH * jnp.exp(log_prob)
    return bins, target


def normal_div_loss(x, tile_max=None):
    x = jnp.asarray(x, jnp.float32).reshape(-1)     # torch .squeeze() -> vector
    n = int(x.shape[0])

    default_tile, vmem_limit = _tile_and_vmem_limit()
    t_max = tile_max if tile_max is not None else default_tile
    tile = min(t_max, _round_up(max(n, 128), 128))

    grid_n = _cdiv(n, tile)                          # number of sample tiles
    n_split = 2 if grid_n >= 2 else 1                # feed both TCs on v7x
    grid_n = _round_up(grid_n, n_split)              # at most 1 sentinel tile
    gps = grid_n // n_split                          # sample tiles per split
    n_pad = grid_n * tile

    bins, target = _params()

    # Sentinel padding instead of masks: each padded sample contributes ~1e-28
    # per bin (negligible); padded bin rows are sliced away before normalizing.
    x_p = jnp.full((1, n_pad), SENT_X, jnp.float32).at[0, :n].set(x)
    bins_p = (jnp.full((NB_PAD, 1), SENT_B, jnp.float32)
              .at[:NB, 0].set(bins * INV_A))         # pre-divided by `a`

    partial_hist = pl.pallas_call(
        partial(_hist_kernel, tile=tile),
        out_shape=jax.ShapeDtypeStruct((NB_PAD, n_split * 128), jnp.float32),
        grid_spec=pltpu.PrefetchScalarGridSpec(
            num_scalar_prefetch=0,
            grid=(n_split, gps),
            in_specs=[
                pl.BlockSpec((1, tile), lambda i, j: (0, i * gps + j)),
                pl.BlockSpec((NB_PAD, 1), lambda i, j: (0, 0)),
            ],
            out_specs=pl.BlockSpec((NB_PAD, 128), lambda i, j: (0, i)),
            scratch_shapes=[pltpu.VMEM((NB_PAD, 128), jnp.float32)],
        ),
        compiler_params=pltpu.CompilerParams(
            dimension_semantics=("parallel", "arbitrary"),
            vmem_limit_bytes=vmem_limit,
        ),
    )(x_p, bins_p)

    # Tiny epilogue (100 bins): combine the per-core / per-lane partials,
    # normalize, and apply KLDivLoss(reduction='batchmean') against the
    # Normal(0, 0.3) target (PyTorch zeros terms where target == 0).
    hist = jnp.sum(partial_hist, axis=1)[:NB]
    hist_norm = hist / jnp.sum(hist)
    log_hist = jnp.log(hist_norm)
    pointwise = jnp.where(target > 0.0,
                          target * (jnp.log(target) - log_hist), 0.0)
    return jnp.sum(pointwise) / NB


def _reference(x):
    """Pure-JAX replica of the PyTorch forward (for validation only)."""
    x = jnp.asarray(x, jnp.float32).reshape(-1)
    bins, target = _params()
    diffs = x[None, :] - bins[:, None]              # (100, N)
    dist = 1.0 / (1.0 + jnp.abs(diffs / A) ** 4)
    hist = dist.sum(1)
    hist = hist / hist.sum()
    log_hist = jnp.log(hist)
    pw = jnp.where(target > 0, target * (jnp.log(target) - log_hist), 0.0)
    return pw.sum() / NB


if __name__ == "__main__":
    # Small case: single tile, single split.
    x_small = jax.random.normal(jax.random.PRNGKey(0), (256,), dtype=jnp.float32)
    loss = jax.block_until_ready(normal_div_loss(x_small))
    ref = jax.block_until_ready(_reference(x_small))
    assert jnp.isfinite(loss), loss
    assert jnp.allclose(loss, ref, rtol=1e-3, atol=1e-5), (loss, ref)

    # Medium case with a small forced tile: exercises the 2-way parallel split,
    # the multi-step grid accumulator, and sentinel padding (1900 -> 4 x 512).
    x_mid = 0.5 * jax.random.normal(jax.random.PRNGKey(1), (1900,),
                                    dtype=jnp.float32)
    loss_m = jax.block_until_ready(normal_div_loss(x_mid, tile_max=512))
    ref_m = jax.block_until_ready(_reference(x_mid))
    assert jnp.isfinite(loss_m), loss_m
    assert jnp.allclose(loss_m, ref_m, rtol=1e-3, atol=1e-5), (loss_m, ref_m)

    # Larger case at the default (big) tile size.
    x_big = 0.3 * jax.random.normal(jax.random.PRNGKey(2), (5000,),
                                    dtype=jnp.float32)
    loss_b = jax.block_until_ready(normal_div_loss(x_big))
    ref_b = jax.block_until_ready(_reference(x_big))
    assert jnp.isfinite(loss_b), loss_b
    assert jnp.allclose(loss_b, ref_b, rtol=1e-3, atol=1e-5), (loss_b, ref_b)

    print("KERNEL_OK")
</pallas_src>

<mosaic_0001>
module attributes {stable_mosaic.version = 11 : i64} {
  func.func @_hist_kernel(%arg0: i32, %arg1: i32, %arg2: memref<1x256xf32, #tpu.memory_space<vmem>>, %arg3: memref<128x1xf32, #tpu.memory_space<vmem>>, %arg4: memref<128x128xf32, #tpu.memory_space<vmem>>, %arg5: memref<128x128xf32, #tpu.memory_space<vmem>>) attributes {dimension_semantics = [#tpu.dimension_semantics<parallel>, #tpu.dimension_semantics<arbitrary>], iteration_bounds = array<i64: 1, 1>, scalar_prefetch = 0 : i64, scratch_operands = 1 : i64, tpu.core_type = #tpu.core_type<tc>, window_params = [{transform_indices = @transform_0, window_bounds = array<i64: 1, 256>}, {pipeline_mode = #tpu.pipeline_mode<synchronous>, transform_indices = @transform_1, window_bounds = array<i64: 128, 1>}, {transform_indices = @transform_2, window_bounds = array<i64: 128, 128>}]} {
    %c0_i32 = arith.constant 0 : i32
    %0 = arith.cmpi eq, %arg1, %c0_i32 : i32
    %1 = arith.extui %0 : i1 to i32
    %c0_i32_0 = arith.constant 0 : i32
    %2 = arith.cmpi ne, %1, %c0_i32_0 : i32
    scf.if %2 {
      %cst_11 = arith.constant 0.000000e+00 : f32
      %24 = vector.broadcast %cst_11 : f32 to vector<128x128xf32>
      %c0_12 = arith.constant 0 : index
      %c0_13 = arith.constant 0 : index
      %25 = vector.load %arg5[%c0_12, %c0_13] : memref<128x128xf32, #tpu.memory_space<vmem>>, vector<128x128xf32>
      tpu.vector_store %arg5[%c0_12, %c0_13], %24 {strides = array<i32>} : memref<128x128xf32, #tpu.memory_space<vmem>>, vector<128x128xf32>,
    } else {
    }
    %c0 = arith.constant 0 : index
    %c0_1 = arith.constant 0 : index
    %3 = vector.load %arg2[%c0, %c0_1] : memref<1x256xf32, #tpu.memory_space<vmem>>, vector<1x256xf32>
    %cst = arith.constant 1.000000e+01 : f32
    %4 = vector.broadcast %cst : f32 to vector<1x256xf32>
    %5 = arith.mulf %3, %4 : vector<1x256xf32>
    %c0_2 = arith.constant 0 : index
    %c0_3 = arith.constant 0 : index
    %6 = vector.load %arg3[%c0_2, %c0_3] : memref<128x1xf32, #tpu.memory_space<vmem>>, vector<128x1xf32>
    %7 = vector.broadcast %5 : vector<1x256xf32> to vector<128x256xf32>
    %8 = vector.broadcast %6 : vector<128x1xf32> to vector<128x256xf32>
    %9 = arith.subf %7, %8 : vector<128x256xf32>
    %10 = arith.mulf %9, %9 : vector<128x256xf32>
    %11 = arith.mulf %10, %10 : vector<128x256xf32>
    %cst_4 = arith.constant 1.000000e+00 : f32
    %12 = vector.broadcast %cst_4 : f32 to vector<128x256xf32>
    %13 = arith.addf %12, %11 : vector<128x256xf32>
    %14 = tpu.reciprocal %13 {approx = true} : vector<128x256xf32> -> vector<128x256xf32>
    %c0_5 = arith.constant 0 : index
    %c0_6 = arith.constant 0 : index
    %15 = vector.load %arg5[%c0_5, %c0_6] : memref<128x128xf32, #tpu.memory_space<vmem>>, vector<128x128xf32>
    %16 = vector.extract_strided_slice %14 {offsets = [0, 0], sizes = [128, 128], strides = [1, 1]} : vector<128x256xf32> to vector<128x128xf32>
    %17 = arith.addf %15, %16 : vector<128x128xf32>
    %18 = vector.extract_strided_slice %14 {offsets = [0, 128], sizes = [128, 128], strides = [1, 1]} : vector<128x256xf32> to vector<128x128xf32>
    %19 = arith.addf %17, %18 : vector<128x128xf32>
    %c0_7 = arith.constant 0 : index
    %c0_8 = arith.constant 0 : index
    %20 = vector.load %arg5[%c0_7, %c0_8] : memref<128x128xf32, #tpu.memory_space<vmem>>, vector<128x128xf32>
    tpu.vector_store %arg5[%c0_7, %c0_8], %19 {strides = array<i32>} : memref<128x128xf32, #tpu.memory_space<vmem>>, vector<128x128xf32>,
    %c0_i32_9 = arith.constant 0 : i32
    %21 = arith.cmpi eq, %arg1, %c0_i32_9 : i32
    %22 = arith.extui %21 : i1 to i32
    %c0_i32_10 = arith.constant 0 : i32
    %23 = arith.cmpi ne, %22, %c0_i32_10 : i32
    scf.if %23 {
      %c0_11 = arith.constant 0 : index
      %c0_12 = arith.constant 0 : index
      %24 = vector.load %arg5[%c0_11, %c0_12] : memref<128x128xf32, #tpu.memory_space<vmem>>, vector<128x128xf32>
      %c0_13 = arith.constant 0 : index
      %c0_14 = arith.constant 0 : index
      %25 = vector.load %arg4[%c0_13, %c0_14] : memref<128x128xf32, #tpu.memory_space<vmem>>, vector<128x128xf32>
      tpu.vector_store %arg4[%c0_13, %c0_14], %24 {strides = array<i32>} : memref<128x128xf32, #tpu.memory_space<vmem>>, vector<128x128xf32>,
    } else {
    }
    return
  }
  func.func @transform_0(%arg0: i32, %arg1: i32) -> (i32, i32) {
    %c1_i32 = arith.constant 1 : i32
    %0 = arith.muli %arg0, %c1_i32 : i32
    %1 = arith.addi %0, %arg1 : i32
    %c0_i32 = arith.constant 0 : i32
    %c0_i32_0 = arith.constant 0 : i32
    return %c0_i32, %1 : i32, i32
  }
  func.func @transform_1(%arg0: i32, %arg1: i32) -> (i32, i32) {
    %c0_i32 = arith.constant 0 : i32
    %c0_i32_0 = arith.constant 0 : i32
    %c0_i32_1 = arith.constant 0 : i32
    return %c0_i32, %c0_i32_0 : i32, i32
  }
  func.func @transform_2(%arg0: i32, %arg1: i32) -> (i32, i32) {
    %c0_i32 = arith.constant 0 : i32
    %c0_i32_0 = arith.constant 0 : i32
    return %c0_i32, %arg0 : i32, i32
  }
}

</mosaic_0001>

<llo_original>
// kernel: tpu_custom_call.1
$region0: #{tpu_custom_call.1}
  #allocation0 [shape = 'u32[]', space=smem, size = 0x4, offset = 0x4, fixed_abs, tag = 'smem constant byte address 0x4 - core index']
  #allocation1 [shape = 'u32[144,128]{1,0:T(1,128)}', space=vmem, size = 0x12000, scoped, tag = 'internal scratch']
  #allocation2 [shape = 'f32[128,128]{1,0:T(8,128)}', space=vmem, size = 0x10000, scoped, tag = 'scratch operand']
  %s0 = inlined_call_operand.vmem [shape: f32[1,256], index: 0, kind: input, shape index: {}]
  %s1 = inlined_call_operand.vmem [shape: f32[128,1], index: 1, kind: input, shape index: {}]
  %s2 = inlined_call_operand.hbm [shape: f32[128,128], index: 2, kind: output, shape index: {}]
  %s3 = sld [smem:[#allocation0]]
  $region26: #{tpu_custom_call.1} parent=0
    _
  %s5 = ssub.s32 1, %s3
  %s6 = scalar_select 0, %s5, %s3
  $region1: #{tpu_custom_call.1} parent=0
    #allocation3 [shape = 'u8[65536]{0}', space=vmem, size = 0x10000, scoped, tag = 'output window, operand 0, single buffered']
    #allocation4 [shape = 's32[1]{0}', space=sflag, size = 0x4, scoped, tag = 'scoped memory for tpu_custom_call.1']
    %7 = vsyncpa [#allocation4], 0
    // Predicated region
    $region2: #{tpu_custom_call.1} parent=1 // pred_check
      _
    $region3: #{tpu_custom_call.1} parent=1 // pred_check_branch
      %9 = sbr.rel (0) target = $region5
    $region4: #{tpu_custom_call.1} parent=1 // pred_region
      %s10 = sadd.s32 0, 0
      %s11 = smul.u32 2, %s10
      %p12 = scmp.lt.s32.totalorder %s11, 1
      %s13 = scalar_select %p12, %s11, 1
      %s14 = scalar_lea.vmem %s0, %s13
      %s15 = sadd.s32 0, 0
      %s16 = smul.u32 2, %s15
    $region5: #{tpu_custom_call.1} parent=1 // pred_fallthru
      _
    // Predicated region
    $region6: #{tpu_custom_call.1} parent=1 // pred_check
      _
    $region7: #{tpu_custom_call.1} parent=1 // pred_check_branch
      %18 = sbr.rel (0) target = $region9
    $region8: #{tpu_custom_call.1} parent=1 // pred_region
      _
    $region9: #{tpu_custom_call.1} parent=1 // pred_fallthru
      _
    %s19 = sadd.s32 0, 0
    %s20 = smul.u32 2, %s19
    %p21 = scmp.lt.s32.totalorder %s20, 1
    %s22 = scalar_select %p21, %s20, 1
    %s23 = scalar_lea.vmem %s0, %s22
    %s24 = sadd.s32 0, 0
    %s25 = smul.u32 2, %s24
    %p26 = scmp.lt.s32.totalorder %s25, 1
    %s27 = scalar_select %p26, %s25, 1
    %s28 = scalar_lea.vmem %s0, %s27
    %s29 = sadd.s32 0, 0
    %s30 = smul.u32 2, %s29
    %p31 = scmp.eq.s32.totalorder 0, 0
    // Predicated region
    $region10: #{tpu_custom_call.1} parent=1 // pred_check
      %p32 = pneg %p31
    $region11: #{tpu_custom_call.1} parent=1 // pred_check_branch
      %34 = sbr.rel (%p32) target = $region13
    $region12: #{tpu_custom_call.1} parent=1 // pred_region
      %35 = vst [vmem:[#allocation2] sm:$0xff] 0.0
      %36 = vst [vmem:[#allocation2 + $0x8] sm:$0xff] 0.0
      %37 = vst [vmem:[#allocation2 + $0x10] sm:$0xff] 0.0
      %38 = vst [vmem:[#allocation2 + $0x18] sm:$0xff] 0.0
      %39 = vst [vmem:[#allocation2 + $0x20] sm:$0xff] 0.0
      %40 = vst [vmem:[#allocation2 + $0x28] sm:$0xff] 0.0
      %41 = vst [vmem:[#allocation2 + $0x30] sm:$0xff] 0.0
      %42 = vst [vmem:[#allocation2 + $0x38] sm:$0xff] 0.0
      %43 = vst [vmem:[#allocation2 + $0x40] sm:$0xff] 0.0
      %44 = vst [vmem:[#allocation2 + $0x48] sm:$0xff] 0.0
      %45 = vst [vmem:[#allocation2 + $0x50] sm:$0xff] 0.0
      %46 = vst [vmem:[#allocation2 + $0x58] sm:$0xff] 0.0
      %47 = vst [vmem:[#allocation2 + $0x60] sm:$0xff] 0.0
      %48 = vst [vmem:[#allocation2 + $0x68] sm:$0xff] 0.0
      %49 = vst [vmem:[#allocation2 + $0x70] sm:$0xff] 0.0
      %50 = vst [vmem:[#allocation2 + $0x78] sm:$0xff] 0.0
    $region13: #{tpu_custom_call.1} parent=1 // pred_fallthru
      _
    %v51 = vld [vmem:[%s28] sm:$0x3]
    %v52 = vmul.f32 %v51, 10.0
    %v53 = vld [vmem:[%s1] sm:$0xff]
    %v54 = vld [vmem:[%s1 + $0x8] sm:$0xff]
    %v55 = vld [vmem:[%s1 + $0x10] sm:$0xff]
    %v56 = vld [vmem:[%s1 + $0x18] sm:$0xff]
    %v57 = vld [vmem:[%s1 + $0x20] sm:$0xff]
    %v58 = vld [vmem:[%s1 + $0x28] sm:$0xff]
    %v59 = vld [vmem:[%s1 + $0x30] sm:$0xff]
    %v60 = vld [vmem:[%s1 + $0x38] sm:$0xff]
    %v61 = vld [vmem:[%s1 + $0x40] sm:$0xff]
    %v62 = vld [vmem:[%s1 + $0x48] sm:$0xff]
    %v63 = vld [vmem:[%s1 + $0x50] sm:$0xff]
    %v64 = vld [vmem:[%s1 + $0x58] sm:$0xff]
    %v65 = vld [vmem:[%s1 + $0x60] sm:$0xff]
    %v66 = vld [vmem:[%s1 + $0x68] sm:$0xff]
    %v67 = vld [vmem:[%s1 + $0x70] sm:$0xff]
    %v68 = vld [vmem:[%s1 + $0x78] sm:$0xff]
    %v70 = vlaneseq
    %v71 = vshrl.u32 %v70, 7
    %v72 = vsub.s32 0, %v71
    %v73 = vrot.slane %v52, %v72
    %v74 = vlaneseq
    %v75 = vshrl.u32 %v74, 7
    %v76 = vsub.s32 1, %v75
    %v77 = vrot.slane %v52, %v76
    %81 = vset.pattern.permute.xlu0 0
    %82 = vperm.xlu0 %81, %v53
    %v83 = vpop.permute.xlu0 %82
    %86 = vset.pattern.permute.xlu0 0
    %87 = vperm.xlu0 %86, %v54
    %v88 = vpop.permute.xlu0 %87
    %91 = vset.pattern.permute.xlu0 0
    %92 = vperm.xlu0 %91, %v55
    %v93 = vpop.permute.xlu0 %92
    %96 = vset.pattern.permute.xlu0 0
    %97 = vperm.xlu0 %96, %v56
    %v98 = vpop.permute.xlu0 %97
    %101 = vset.pattern.permute.xlu0 0
    %102 = vperm.xlu0 %101, %v57
    %v103 = vpop.permute.xlu0 %102
    %106 = vset.pattern.permute.xlu0 0
    %107 = vperm.xlu0 %106, %v58
    %v108 = vpop.permute.xlu0 %107
    %111 = vset.pattern.permute.xlu0 0
    %112 = vperm.xlu0 %111, %v59
    %v113 = vpop.permute.xlu0 %112
    %116 = vset.pattern.permute.xlu0 0
    %117 = vperm.xlu0 %116, %v60
    %v118 = vpop.permute.xlu0 %117
    %121 = vset.pattern.permute.xlu0 0
    %122 = vperm.xlu0 %121, %v61
    %v123 = vpop.permute.xlu0 %122
    %126 = vset.pattern.permute.xlu0 0
    %127 = vperm.xlu0 %126, %v62
    %v128 = vpop.permute.xlu0 %127
    %131 = vset.pattern.permute.xlu0 0
    %132 = vperm.xlu0 %131, %v63
    %v133 = vpop.permute.xlu0 %132
    %136 = vset.pattern.permute.xlu0 0
    %137 = vperm.xlu0 %136, %v64
    %v138 = vpop.permute.xlu0 %137
    %141 = vset.pattern.permute.xlu0 0
    %142 = vperm.xlu0 %141, %v65
    %v143 = vpop.permute.xlu0 %142
    %146 = vset.pattern.permute.xlu0 0
    %147 = vperm.xlu0 %146, %v66
    %v148 = vpop.permute.xlu0 %147
    %151 = vset.pattern.permute.xlu0 0
    %152 = vperm.xlu0 %151, %v67
    %v153 = vpop.permute.xlu0 %152
    %156 = vset.pattern.permute.xlu0 0
    %157 = vperm.xlu0 %156, %v68
    %v158 = vpop.permute.xlu0 %157
    %v160 = vsub.f32 %v73, %v83
    %v161 = vsub.f32 %v77, %v83
    %v162 = vsub.f32 %v73, %v88
    %v163 = vsub.f32 %v77, %v88
    %v164 = vsub.f32 %v73, %v93
    %v165 = vsub.f32 %v77, %v93
    %v166 = vsub.f32 %v73, %v98
    %v167 = vsub.f32 %v77, %v98
    %v168 = vsub.f32 %v73, %v103
    %v169 = vsub.f32 %v77, %v103
    %v170 = vsub.f32 %v73, %v108
    %v171 = vsub.f32 %v77, %v108
    %v172 = vsub.f32 %v73, %v113
    %v173 = vsub.f32 %v77, %v113
    %v174 = vsub.f32 %v73, %v118
    %v175 = vsub.f32 %v77, %v118
    %v176 = vsub.f32 %v73, %v123
    %v177 = vsub.f32 %v77, %v123
    %v178 = vsub.f32 %v73, %v128
    %v179 = vsub.f32 %v77, %v128
    %v180 = vsub.f32 %v73, %v133
    %v181 = vsub.f32 %v77, %v133
    %v182 = vsub.f32 %v73, %v138
    %v183 = vsub.f32 %v77, %v138
    %v184 = vsub.f32 %v73, %v143
    %v185 = vsub.f32 %v77, %v143
    %v186 = vsub.f32 %v73, %v148
    %v187 = vsub.f32 %v77, %v148
    %v188 = vsub.f32 %v73, %v153
    %v189 = vsub.f32 %v77, %v153
    %v190 = vsub.f32 %v73, %v158
    %v191 = vsub.f32 %v77, %v158
    %v192 = vmul.f32 %v160, %v160
    %v193 = vmul.f32 %v161, %v161
    %v194 = vmul.f32 %v162, %v162
    %v195 = vmul.f32 %v163, %v163
    %v196 = vmul.f32 %v164, %v164
    %v197 = vmul.f32 %v165, %v165
    %v198 = vmul.f32 %v166, %v166
    %v199 = vmul.f32 %v167, %v167
    %v200 = vmul.f32 %v168, %v168
    %v201 = vmul.f32 %v169, %v169
    %v202 = vmul.f32 %v170, %v170
    %v203 = vmul.f32 %v171, %v171
    %v204 = vmul.f32 %v172, %v172
    %v205 = vmul.f32 %v173, %v173
    %v206 = vmul.f32 %v174, %v174
    %v207 = vmul.f32 %v175, %v175
    %v208 = vmul.f32 %v176, %v176
    %v209 = vmul.f32 %v177, %v177
    %v210 = vmul.f32 %v178, %v178
    %v211 = vmul.f32 %v179, %v179
    %v212 = vmul.f32 %v180, %v180
    %v213 = vmul.f32 %v181, %v181
    %v214 = vmul.f32 %v182, %v182
    %v215 = vmul.f32 %v183, %v183
    %v216 = vmul.f32 %v184, %v184
    %v217 = vmul.f32 %v185, %v185
    %v218 = vmul.f32 %v186, %v186
    %v219 = vmul.f32 %v187, %v187
    %v220 = vmul.f32 %v188, %v188
    %v221 = vmul.f32 %v189, %v189
    %v222 = vmul.f32 %v190, %v190
    %v223 = vmul.f32 %v191, %v191
    %v224 = vmul.f32 %v192, %v192
    %v225 = vmul.f32 %v193, %v193
    %v226 = vmul.f32 %v194, %v194
    %v227 = vmul.f32 %v195, %v195
    %v228 = vmul.f32 %v196, %v196
    %v229 = vmul.f32 %v197, %v197
    %v230 = vmul.f32 %v198, %v198
    %v231 = vmul.f32 %v199, %v199
    %v232 = vmul.f32 %v200, %v200
    %v233 = vmul.f32 %v201, %v201
    %v234 = vmul.f32 %v202, %v202
    %v235 = vmul.f32 %v203, %v203
    %v236 = vmul.f32 %v204, %v204
    %v237 = vmul.f32 %v205, %v205
    %v238 = vmul.f32 %v206, %v206
    %v239 = vmul.f32 %v207, %v207
    %v240 = vmul.f32 %v208, %v208
    %v241 = vmul.f32 %v209, %v209
    %v242 = vmul.f32 %v210, %v210
    %v243 = vmul.f32 %v211, %v211
    %v244 = vmul.f32 %v212, %v212
    %v245 = vmul.f32 %v213, %v213
    %v246 = vmul.f32 %v214, %v214
    %v247 = vmul.f32 %v215, %v215
    %v248 = vmul.f32 %v216, %v216
    %v249 = vmul.f32 %v217, %v217
    %v250 = vmul.f32 %v218, %v218
    %v251 = vmul.f32 %v219, %v219
    %v252 = vmul.f32 %v220, %v220
    %v253 = vmul.f32 %v221, %v221
    %v254 = vmul.f32 %v222, %v222
    %v255 = vmul.f32 %v223, %v223
    %v256 = vadd.f32 %v224, 1.0
    %v257 = vadd.f32 %v225, 1.0
    %v258 = vadd.f32 %v226, 1.0
    %v259 = vadd.f32 %v227, 1.0
    %v260 = vadd.f32 %v228, 1.0
    %v261 = vadd.f32 %v229, 1.0
    %v262 = vadd.f32 %v230, 1.0
    %v263 = vadd.f32 %v231, 1.0
    %v264 = vadd.f32 %v232, 1.0
    %v265 = vadd.f32 %v233, 1.0
    %v266 = vadd.f32 %v234, 1.0
    %v267 = vadd.f32 %v235, 1.0
    %v268 = vadd.f32 %v236, 1.0
    %v269 = vadd.f32 %v237, 1.0
    %v270 = vadd.f32 %v238, 1.0
    %v271 = vadd.f32 %v239, 1.0
    %v272 = vadd.f32 %v240, 1.0
    %v273 = vadd.f32 %v241, 1.0
    %v274 = vadd.f32 %v242, 1.0
    %v275 = vadd.f32 %v243, 1.0
    %v276 = vadd.f32 %v244, 1.0
    %v277 = vadd.f32 %v245, 1.0
    %v278 = vadd.f32 %v246, 1.0
    %v279 = vadd.f32 %v247, 1.0
    %v280 = vadd.f32 %v248, 1.0
    %v281 = vadd.f32 %v249, 1.0
    %v282 = vadd.f32 %v250, 1.0
    %v283 = vadd.f32 %v251, 1.0
    %v284 = vadd.f32 %v252, 1.0
    %v285 = vadd.f32 %v253, 1.0
    %v286 = vadd.f32 %v254, 1.0
    %v287 = vadd.f32 %v255, 1.0
    %v288 = vrcp.pop %v256
    %v289 = vrcp.pop %v257
    %v290 = vrcp.pop %v258
    %v291 = vrcp.pop %v259
    %v292 = vrcp.pop %v260
    %v293 = vrcp.pop %v261
    %v294 = vrcp.pop %v262
    %v295 = vrcp.pop %v263
    %v296 = vrcp.pop %v264
    %v297 = vrcp.pop %v265
    %v298 = vrcp.pop %v266
    %v299 = vrcp.pop %v267
    %v300 = vrcp.pop %v268
    %v301 = vrcp.pop %v269
    %v302 = vrcp.pop %v270
    %v303 = vrcp.pop %v271
    %v304 = vrcp.pop %v272
    %v305 = vrcp.pop %v273
    %v306 = vrcp.pop %v274
    %v307 = vrcp.pop %v275
    %v308 = vrcp.pop %v276
    %v309 = vrcp.pop %v277
    %v310 = vrcp.pop %v278
    %v311 = vrcp.pop %v279
    %v312 = vrcp.pop %v280
    %v313 = vrcp.pop %v281
    %v314 = vrcp.pop %v282
    %v315 = vrcp.pop %v283
    %v316 = vrcp.pop %v284
    %v317 = vrcp.pop %v285
    %v318 = vrcp.pop %v286
    %v319 = vrcp.pop %v287
    %v320 = vld [vmem:[#allocation2] sm:$0xff]
    %v321 = vld [vmem:[#allocation2 + $0x8] sm:$0xff]
    %v322 = vld [vmem:[#allocation2 + $0x10] sm:$0xff]
    %v323 = vld [vmem:[#allocation2 + $0x18] sm:$0xff]
    %v324 = vld [vmem:[#allocation2 + $0x20] sm:$0xff]
    %v325 = vld [vmem:[#allocation2 + $0x28] sm:$0xff]
    %v326 = vld [vmem:[#allocation2 + $0x30] sm:$0xff]
    %v327 = vld [vmem:[#allocation2 + $0x38] sm:$0xff]
    %v328 = vld [vmem:[#allocation2 + $0x40] sm:$0xff]
    %v329 = vld [vmem:[#allocation2 + $0x48] sm:$0xff]
    %v330 = vld [vmem:[#allocation2 + $0x50] sm:$0xff]
    %v331 = vld [vmem:[#allocation2 + $0x58] sm:$0xff]
    %v332 = vld [vmem:[#allocation2 + $0x60] sm:$0xff]
    %v333 = vld [vmem:[#allocation2 + $0x68] sm:$0xff]
    %v334 = vld [vmem:[#allocation2 + $0x70] sm:$0xff]
    %v335 = vld [vmem:[#allocation2 + $0x78] sm:$0xff]
    %v336 = vadd.f32 %v320, %v288
    %v337 = vadd.f32 %v321, %v290
    %v338 = vadd.f32 %v322, %v292
    %v339 = vadd.f32 %v323, %v294
    %v340 = vadd.f32 %v324, %v296
    %v341 = vadd.f32 %v325, %v298
    %v342 = vadd.f32 %v326, %v300
    %v343 = vadd.f32 %v327, %v302
    %v344 = vadd.f32 %v328, %v304
    %v345 = vadd.f32 %v329, %v306
    %v346 = vadd.f32 %v330, %v308
    %v347 = vadd.f32 %v331, %v310
    %v348 = vadd.f32 %v332, %v312
    %v349 = vadd.f32 %v333, %v314
    %v350 = vadd.f32 %v334, %v316
    %v351 = vadd.f32 %v335, %v318
    %v352 = vadd.f32 %v336, %v289
    %v353 = vadd.f32 %v337, %v291
    %v354 = vadd.f32 %v338, %v293
    %v355 = vadd.f32 %v339, %v295
    %v356 = vadd.f32 %v340, %v297
    %v357 = vadd.f32 %v341, %v299
    %v358 = vadd.f32 %v342, %v301
    %v359 = vadd.f32 %v343, %v303
    %v360 = vadd.f32 %v344, %v305
    %v361 = vadd.f32 %v345, %v307
    %v362 = vadd.f32 %v346, %v309
    %v363 = vadd.f32 %v347, %v311
    %v364 = vadd.f32 %v348, %v313
    %v365 = vadd.f32 %v349, %v315
    %v366 = vadd.f32 %v350, %v317
    %v367 = vadd.f32 %v351, %v319
    %368 = vst [vmem:[#allocation2] sm:$0xff] %v352
    %369 = vst [vmem:[#allocation2 + $0x8] sm:$0xff] %v353
    %370 = vst [vmem:[#allocation2 + $0x10] sm:$0xff] %v354
    %371 = vst [vmem:[#allocation2 + $0x18] sm:$0xff] %v355
    %372 = vst [vmem:[#allocation2 + $0x20] sm:$0xff] %v356
    %373 = vst [vmem:[#allocation2 + $0x28] sm:$0xff] %v357
    %374 = vst [vmem:[#allocation2 + $0x30] sm:$0xff] %v358
    %375 = vst [vmem:[#allocation2 + $0x38] sm:$0xff] %v359
    %376 = vst [vmem:[#allocation2 + $0x40] sm:$0xff] %v360
    %377 = vst [vmem:[#allocation2 + $0x48] sm:$0xff] %v361
    %378 = vst [vmem:[#allocation2 + $0x50] sm:$0xff] %v362
    %379 = vst [vmem:[#allocation2 + $0x58] sm:$0xff] %v363
    %380 = vst [vmem:[#allocation2 + $0x60] sm:$0xff] %v364
    %381 = vst [vmem:[#allocation2 + $0x68] sm:$0xff] %v365
    %382 = vst [vmem:[#allocation2 + $0x70] sm:$0xff] %v366
    %383 = vst [vmem:[#allocation2 + $0x78] sm:$0xff] %v367
    // Predicated region
    $region14: #{tpu_custom_call.1} parent=1 // pred_check
      %p384 = pneg %p31
    $region15: #{tpu_custom_call.1} parent=1 // pred_check_branch
      %386 = sbr.rel (%p384) target = $region17
    $region16: #{tpu_custom_call.1} parent=1 // pred_region
      %v387 = vld [vmem:[#allocation2] sm:$0xff]
      %v388 = vld [vmem:[#allocation2 + $0x8] sm:$0xff]
      %v389 = vld [vmem:[#allocation2 + $0x10] sm:$0xff]
      %v390 = vld [vmem:[#allocation2 + $0x18] sm:$0xff]
      %v391 = vld [vmem:[#allocation2 + $0x20] sm:$0xff]
      %v392 = vld [vmem:[#allocation2 + $0x28] sm:$0xff]
      %v393 = vld [vmem:[#allocation2 + $0x30] sm:$0xff]
      %v394 = vld [vmem:[#allocation2 + $0x38] sm:$0xff]
      %v395 = vld [vmem:[#allocation2 + $0x40] sm:$0xff]
      %v396 = vld [vmem:[#allocation2 + $0x48] sm:$0xff]
      %v397 = vld [vmem:[#allocation2 + $0x50] sm:$0xff]
      %v398 = vld [vmem:[#allocation2 + $0x58] sm:$0xff]
      %v399 = vld [vmem:[#allocation2 + $0x60] sm:$0xff]
      %v400 = vld [vmem:[#allocation2 + $0x68] sm:$0xff]
      %v401 = vld [vmem:[#allocation2 + $0x70] sm:$0xff]
      %v402 = vld [vmem:[#allocation2 + $0x78] sm:$0xff]
      %403 = vst [vmem:[#allocation3] sm:$0xff] %v387
      %404 = vst [vmem:[#allocation3 + $0x8] sm:$0xff] %v388
      %405 = vst [vmem:[#allocation3 + $0x10] sm:$0xff] %v389
      %406 = vst [vmem:[#allocation3 + $0x18] sm:$0xff] %v390
      %407 = vst [vmem:[#allocation3 + $0x20] sm:$0xff] %v391
      %408 = vst [vmem:[#allocation3 + $0x28] sm:$0xff] %v392
      %409 = vst [vmem:[#allocation3 + $0x30] sm:$0xff] %v393
      %410 = vst [vmem:[#allocation3 + $0x38] sm:$0xff] %v394
      %411 = vst [vmem:[#allocation3 + $0x40] sm:$0xff] %v395
      %412 = vst [vmem:[#allocation3 + $0x48] sm:$0xff] %v396
      %413 = vst [vmem:[#allocation3 + $0x50] sm:$0xff] %v397
      %414 = vst [vmem:[#allocation3 + $0x58] sm:$0xff] %v398
      %415 = vst [vmem:[#allocation3 + $0x60] sm:$0xff] %v399
      %416 = vst [vmem:[#allocation3 + $0x68] sm:$0xff] %v400
      %417 = vst [vmem:[#allocation3 + $0x70] sm:$0xff] %v401
      %418 = vst [vmem:[#allocation3 + $0x78] sm:$0xff] %v402
    $region17: #{tpu_custom_call.1} parent=1 // pred_fallthru
      _
    // Predicated region
    $region18: #{tpu_custom_call.1} parent=1 // pred_check
      _
    $region19: #{tpu_custom_call.1} parent=1 // pred_check_branch
      %420 = sbr.rel (0) target = $region21
    $region20: #{tpu_custom_call.1} parent=1 // pred_region
      %s422 = ssub.s32 2048, 2048
      %423 = vsyncadd [#allocation4], %s422
      %s424 = sshll.u32 [#allocation3], 4
      %s425 = int_to_ptr.vmem [resolvable:$true] %s424
      %430 = dma.vmem_to_hbm [thread:$0]  %s425, 2048, %s2, [#allocation4], 128, 128, 8
    $region21: #{tpu_custom_call.1} parent=1 // pred_fallthru
      _
    // Predicated region
    $region22: #{tpu_custom_call.1} parent=1 // pred_check
      _
    $region23: #{tpu_custom_call.1} parent=1 // pred_check_branch
      %432 = sbr.rel (0) target = $region25
    $region24: #{tpu_custom_call.1} parent=1 // pred_region
      %433 = dma.done [#allocation4], 2048
    $region25: #{tpu_custom_call.1} parent=1 // pred_fallthru
      _
    %434 = vsyncpa [#allocation4], 1

</llo_original>
